<compile_context>
chip_gen: v5e
topology: v5e:2x2
jax: 0.10.0
libtpu: 0.0.40
codegen_flags: <defaults>
</compile_context>

<pallas_src>
import functools

import jax
import jax.numpy as jnp
from jax.experimental import pallas as pl
from jax.experimental.pallas import tpu as pltpu


# --------------------------------------------------------------------------- #
# Helpers
# --------------------------------------------------------------------------- #
def _round_up(x, m):
    return ((x + m - 1) // m) * m


def _vmem_capacity_bytes():
    """Per-core VMEM capacity (trace-time query, with a conservative fallback)."""
    try:
        info = pltpu.get_tpu_info()
        cap = int(getattr(info, "vmem_capacity_bytes", 0))
        if cap > 0:
            return cap
    except Exception:
        pass
    return 64 << 20  # conservative: v7x per-TensorCore VMEM


def _vmem_estimate(tm, tf, e_pad, in_dsz, w_dsz, out_dsz, use_scratch):
    """Resident VMEM bytes for one pipelined step (double-buffered BlockSpecs)."""
    return (2 * tm * e_pad * in_dsz        # x tiles
            + 2 * tm * e_pad * out_dsz     # output tiles
            + 2 * e_pad * tf * w_dsz       # W1 chunks
            + 2 * tf * e_pad * w_dsz       # W2 chunks
            + 2 * 8 * tf * 4               # b1 chunks (f32, sublane-padded)
            + 2 * 8 * e_pad * 4            # b2       (f32, sublane-padded)
            + tm * tf * 4                  # f32 `h = relu(x@W1+b1)` intermediate
            + (tm * e_pad * 4 if use_scratch else 0))


def _choose_tiles(m, e_pad, f_pad, in_dsz, w_dsz, out_dsz, budget, scratch_if_chunked):
    row_align = 16 if in_dsz == 2 else 8
    m_cap = _round_up(m, row_align)
    tm_cands = [t for t in (1024, 512, 256, 128, 64, 32, 16, 8) if t % row_align == 0]

    def fits(tm, tf, scr):
        return int(_vmem_estimate(tm, tf, e_pad, in_dsz, w_dsz, out_dsz, scr) * 1.15) <= budget

    # 1) Weights-resident mode: whole padded W1/W2 held in VMEM, DMA'd once.
    #    Maximize tm (amortizes per-step pipeline overhead, feeds the MXU).
    for tm in tm_cands:
        tm_e = min(tm, m_cap)
        if fits(tm_e, f_pad, False):
            return tm_e, f_pad

    # 2) Weight-streaming mode: weight HBM re-fetch scales as M/tm, so grow tm
    #    first; then take the largest tf (>=512 preferred) that still fits.
    tf_cands = [tf for tf in (512, 256, 128) if tf <= f_pad and f_pad % tf == 0] or [f_pad]
    for tm in tm_cands:
        tm_e = min(tm, m_cap)
        for tf in tf_cands:
            if fits(tm_e, tf, scratch_if_chunked):
                return tm_e, tf

    # 3) Fallback: smallest tiles (extreme shapes on tiny-VMEM parts).
    return min(tm_cands[-1], m_cap), tf_cands[-1]


# --------------------------------------------------------------------------- #
# Kernels
# --------------------------------------------------------------------------- #
def _ffn_kernel_resident(x_ref, w1_ref, b1_ref, w2_ref, b2_ref, o_ref):
    # Whole (padded) W1/W2 resident in VMEM; single pass per row tile.
    h = jnp.dot(x_ref[...], w1_ref[...], preferred_element_type=jnp.float32)
    h = jnp.maximum(h + b1_ref[...], 0.0)
    out = jnp.dot(h.astype(w2_ref.dtype), w2_ref[...],
                  preferred_element_type=jnp.float32) + b2_ref[...]
    o_ref[...] = out.astype(o_ref.dtype)


def _ffn_kernel_chunked_f32out(x_ref, w1_ref, b1_ref, w2_ref, b2_ref, o_ref):
    # Hidden dim chunked; the f32 output tile (resident across the f axis)
    # doubles as the accumulator -> no separate VMEM scratch needed.
    f = pl.program_id(1)

    @pl.when(f == 0)
    def _init():
        o_ref[...] = jnp.zeros_like(o_ref)

    h = jnp.dot(x_ref[...], w1_ref[...], preferred_element_type=jnp.float32)
    h = jnp.maximum(h + b1_ref[...], 0.0)
    o_ref[...] += jnp.dot(h.astype(w2_ref.dtype), w2_ref[...],
                          preferred_element_type=jnp.float32)

    @pl.when(f == pl.num_programs(1) - 1)
    def _finalize():
        o_ref[...] += b2_ref[...]


def _ffn_kernel_chunked_scratch(x_ref, w1_ref, b1_ref, w2_ref, b2_ref, o_ref, acc_ref):
    # Hidden dim chunked; non-f32 output dtype -> accumulate in an f32 scratch.
    f = pl.program_id(1)

    @pl.when(f == 0)
    def _init():
        acc_ref[...] = jnp.zeros_like(acc_ref)

    h = jnp.dot(x_ref[...], w1_ref[...], preferred_element_type=jnp.float32)
    h = jnp.maximum(h + b1_ref[...], 0.0)
    acc_ref[...] += jnp.dot(h.astype(w2_ref.dtype), w2_ref[...],
                            preferred_element_type=jnp.float32)

    @pl.when(f == pl.num_programs(1) - 1)
    def _finalize():
        o_ref[...] = (acc_ref[...] + b2_ref[...]).astype(o_ref.dtype)


# --------------------------------------------------------------------------- #
# Wrapper
# --------------------------------------------------------------------------- #
@functools.partial(
    jax.jit,
    static_argnames=("e_orig", "cast_to_bf16", "tm_override", "tf_override"))
def _ffn_padded(x, w1_p, b1_p, w2_p, b2_p, *, e_orig, cast_to_bf16,
                tm_override=None, tf_override=None):
    b, s, e_in = x.shape
    assert e_in == e_orig
    m = b * s
    e_pad, f_pad = w1_p.shape

    out_dtype = x.dtype
    in_dtype = jnp.bfloat16 if cast_to_bf16 else x.dtype
    in_dsz = jnp.dtype(in_dtype).itemsize
    w_dsz = jnp.dtype(w1_p.dtype).itemsize
    out_dsz = jnp.dtype(out_dtype).itemsize
    row_align = 16 if in_dsz == 2 else 8

    # ---- Generation-aware VMEM budget & tile selection. ---------------------
    capacity = _vmem_capacity_bytes()
    budget = int(capacity * 0.85)
    scratch_if_chunked = (out_dtype != jnp.float32)
    tm, tf = _choose_tiles(m, e_pad, f_pad, in_dsz, w_dsz, out_dsz, budget,
                           scratch_if_chunked)
    if tm_override is not None:
        tm = max(row_align,
                 _round_up(min(tm_override, _round_up(m, row_align)), row_align))
    if tf_override is not None:
        tf = min(_round_up(tf_override, 128), f_pad)
        while f_pad % tf != 0:       # keep tf a divisor of the padded hidden dim
            tf -= 128

    m_pad = _round_up(m, tm)
    n_row_tiles = m_pad // tm
    n_f_tiles = f_pad // tf
    use_scratch = (n_f_tiles > 1) and scratch_if_chunked

    # ---- Activations: flatten, optional bf16 cast, pad only if needed. ------
    x2d = x.reshape(m, e_orig)
    if cast_to_bf16 and x2d.dtype != jnp.bfloat16:
        x2d = x2d.astype(jnp.bfloat16)
    if m_pad > m or e_pad > e_orig:
        x2d = jnp.pad(x2d, ((0, m_pad - m), (0, e_pad - e_orig)))

    est = _vmem_estimate(tm, tf, e_pad, in_dsz, w_dsz, out_dsz, use_scratch)
    vmem_limit = min(int(capacity * 0.95),
                     max(16 << 20, int(est * 1.3) + (2 << 20)))

    weight_bytes = (w1_p.size + w2_p.size) * w_dsz + (b1_p.size + b2_p.size) * 4
    weight_streams = 1 if n_f_tiles == 1 else n_row_tiles   # re-stream per row tile
    cost = pl.CostEstimate(
        flops=4 * m_pad * e_pad * f_pad,
        transcendentals=0,
        bytes_accessed=int(m_pad * e_pad * (in_dsz + out_dsz)
                           + weight_streams * weight_bytes),
    )

    if n_f_tiles == 1:
        # Weights-resident single pass: W1/W2 block indices are grid-invariant,
        # so they are DMA'd from HBM exactly once for the whole call.
        out_p = pl.pallas_call(
            _ffn_kernel_resident,
            out_shape=jax.ShapeDtypeStruct((m_pad, e_pad), out_dtype),
            grid_spec=pltpu.PrefetchScalarGridSpec(
                num_scalar_prefetch=0,
                grid=(n_row_tiles,),
                in_specs=[
                    pl.BlockSpec((tm, e_pad), lambda i: (i, 0)),      # x rows
                    pl.BlockSpec((e_pad, f_pad), lambda i: (0, 0)),   # W1 (resident)
                    pl.BlockSpec((1, f_pad), lambda i: (0, 0)),       # b1
                    pl.BlockSpec((f_pad, e_pad), lambda i: (0, 0)),   # W2 (resident)
                    pl.BlockSpec((1, e_pad), lambda i: (0, 0)),       # b2
                ],
                out_specs=pl.BlockSpec((tm, e_pad), lambda i: (i, 0)),
            ),
            compiler_params=pltpu.CompilerParams(
                dimension_semantics=("parallel",),
                vmem_limit_bytes=vmem_limit,
            ),
            cost_estimate=cost,
        )(x2d, w1_p, b1_p, w2_p, b2_p)
    else:
        # Weight-streaming mode: hidden dim chunked (innermost, "arbitrary").
        # TODO(synk): on v7x consider pltpu.CORE_PARALLEL on the row axis to
        # guarantee both TensorCores are used.
        kernel = (_ffn_kernel_chunked_scratch if use_scratch
                  else _ffn_kernel_chunked_f32out)
        scratch = [pltpu.VMEM((tm, e_pad), jnp.float32)] if use_scratch else []
        out_p = pl.pallas_call(
            kernel,
            out_shape=jax.ShapeDtypeStruct((m_pad, e_pad), out_dtype),
            grid_spec=pltpu.PrefetchScalarGridSpec(
                num_scalar_prefetch=0,
                grid=(n_row_tiles, n_f_tiles),
                in_specs=[
                    pl.BlockSpec((tm, e_pad), lambda i, f: (i, 0)),   # x rows
                    pl.BlockSpec((e_pad, tf), lambda i, f: (0, f)),   # W1 chunk
                    pl.BlockSpec((1, tf), lambda i, f: (0, f)),       # b1 chunk
                    pl.BlockSpec((tf, e_pad), lambda i, f: (f, 0)),   # W2 chunk
                    pl.BlockSpec((1, e_pad), lambda i, f: (0, 0)),    # b2
                ],
                out_specs=pl.BlockSpec((tm, e_pad), lambda i, f: (i, 0)),
                scratch_shapes=scratch,
            ),
            compiler_params=pltpu.CompilerParams(
                dimension_semantics=("parallel", "arbitrary"),
                vmem_limit_bytes=vmem_limit,
            ),
            cost_estimate=cost,
        )(x2d, w1_p, b1_p, w2_p, b2_p)

    return out_p[:m, :e_orig].reshape(b, s, e_orig)


def make_feed_forward(w1, b1, w2, b2, *, cast_to_bf16=False, tm=None, tf=None):
    """Pad (and optionally bf16-cast) the Linear parameters ONCE and return a
    jitted feed-forward callable x[B, S, E] -> [B, S, E].

    Hoisting weight padding out of the per-call path removes a full extra HBM
    read+write of the weights on every forward call.
    """
    e, f = w1.shape
    assert w2.shape == (f, e) and b1.shape == (f,) and b2.shape == (e,)
    e_pad = _round_up(e, 128)
    f_pad = _round_up(f, 128)
    w_dtype = jnp.bfloat16 if cast_to_bf16 else w1.dtype

    w1_p = jnp.pad(w1, ((0, e_pad - e), (0, f_pad - f))).astype(w_dtype)
    w2_p = jnp.pad(w2, ((0, f_pad - f), (0, e_pad - e))).astype(w_dtype)
    # Bias + ReLU epilogue stays in f32 (exact everywhere; v5e has no bf16 VALU).
    b1_p = jnp.pad(b1.astype(jnp.float32), (0, f_pad - f)).reshape(1, f_pad)
    b2_p = jnp.pad(b2.astype(jnp.float32), (0, e_pad - e)).reshape(1, e_pad)
    w1_p, w2_p, b1_p, b2_p = jax.block_until_ready((w1_p, w2_p, b1_p, b2_p))

    def fwd(x, len_chair=None):   # len_chair is unused in the reference forward
        del len_chair
        return _ffn_padded(x, w1_p, b1_p, w2_p, b2_p, e_orig=e,
                           cast_to_bf16=cast_to_bf16,
                           tm_override=tm, tf_override=tf)

    return fwd


def _ref_feed_forward(x, w1, b1, w2, b2):
    h = jnp.maximum(x @ w1 + b1, 0.0)
    return h @ w2 + b2


# --------------------------------------------------------------------------- #
# Self-test
# --------------------------------------------------------------------------- #
if __name__ == "__main__":
    key = jax.random.PRNGKey(0)

    def make_params(k, e, f):
        kw1, kb1, kw2, kb2 = jax.random.split(k, 4)
        bound1 = 1.0 / (e ** 0.5)
        w1 = jax.random.uniform(kw1, (e, f), jnp.float32, -bound1, bound1)
        b1 = jax.random.uniform(kb1, (f,), jnp.float32, -bound1, bound1)
        bound2 = 1.0 / (f ** 0.5)
        w2 = jax.random.uniform(kw2, (f, e), jnp.float32, -bound2, bound2)
        b2 = jax.random.uniform(kb2, (e,), jnp.float32, -bound2, bound2)
        return w1, b1, w2, b2

    k1, k2, k3, kx1, kx2, kx3 = jax.random.split(key, 6)

    # Test 1: module config embeddings_nums=32, ff_nums=64, input [2, 8, 32].
    # Auto-tiling -> weights-resident single-pass path.
    B, S, E, F = 2, 8, 32, 64
    x = jax.random.normal(kx1, (B, S, E), dtype=jnp.float32)
    p1 = make_params(k1, E, F)
    ffn1 = make_feed_forward(*p1)
    out = jax.block_until_ready(ffn1(x))
    ref = _ref_feed_forward(x, *p1)
    assert out.shape == (B, S, E)
    assert jnp.allclose(out, ref, atol=1e-4, rtol=1e-4), "mismatch (test 1)"

    # Test 2: ragged / padded sizes (M, E, F not tile multiples); forced small
    # tiles to exercise the weight-streaming path with the output-resident
    # f32 accumulator (multiple row tiles AND multiple F chunks).
    B2, S2, E2, F2 = 3, 50, 96, 320
    x2 = jax.random.normal(kx2, (B2, S2, E2), dtype=jnp.float32)
    p2 = make_params(k2, E2, F2)
    ffn2 = make_feed_forward(*p2, tm=64, tf=128)
    out2 = jax.block_until_ready(ffn2(x2))
    ref2 = _ref_feed_forward(x2, *p2)
    assert out2.shape == (B2, S2, E2)
    assert jnp.allclose(out2, ref2, atol=1e-4, rtol=1e-4), "mismatch (test 2)"

    # Test 3: bf16-MXU path (v6e/v7x fast path) on the chunked grid; the
    # bias/ReLU/accumulation epilogue stays in f32.
    B3, S3, E3, F3 = 2, 16, 128, 256
    x3 = jax.random.normal(kx3, (B3, S3, E3), dtype=jnp.float32)
    p3 = make_params(k3, E3, F3)
    ffn3 = make_feed_forward(*p3, cast_to_bf16=True, tm=16, tf=128)
    out3 = jax.block_until_ready(ffn3(x3))
    ref3 = _ref_feed_forward(x3, *p3)
    assert out3.shape == (B3, S3, E3)
    assert jnp.allclose(out3, ref3, atol=5e-2, rtol=5e-2), "mismatch (test 3)"

    print("KERNEL_OK")
</pallas_src>

<mosaic_0001>
module attributes {stable_mosaic.version = 11 : i64} {
  func.func @_ffn_kernel_resident(%arg0: i32, %arg1: memref<16x128xf32, #tpu.memory_space<vmem>>, %arg2: memref<128x128xf32, #tpu.memory_space<vmem>>, %arg3: memref<1x128xf32, #tpu.memory_space<vmem>>, %arg4: memref<128x128xf32, #tpu.memory_space<vmem>>, %arg5: memref<1x128xf32, #tpu.memory_space<vmem>>, %arg6: memref<16x128xf32, #tpu.memory_space<vmem>>) attributes {dimension_semantics = [#tpu.dimension_semantics<parallel>], iteration_bounds = array<i64: 1>, scalar_prefetch = 0 : i64, scratch_operands = 0 : i64, tpu.core_type = #tpu.core_type<tc>, window_params = [{transform_indices = @transform_0, window_bounds = array<i64: 16, 128>}, {pipeline_mode = #tpu.pipeline_mode<synchronous>, transform_indices = @transform_1, window_bounds = array<i64: 128, 128>}, {pipeline_mode = #tpu.pipeline_mode<synchronous>, transform_indices = @transform_2, window_bounds = array<i64: 1, 128>}, {pipeline_mode = #tpu.pipeline_mode<synchronous>, transform_indices = @transform_3, window_bounds = array<i64: 128, 128>}, {pipeline_mode = #tpu.pipeline_mode<synchronous>, transform_indices = @transform_4, window_bounds = array<i64: 1, 128>}, {transform_indices = @transform_5, window_bounds = array<i64: 16, 128>}]} {
    %c0 = arith.constant 0 : index
    %c0_0 = arith.constant 0 : index
    %0 = vector.load %arg1[%c0, %c0_0] : memref<16x128xf32, #tpu.memory_space<vmem>>, vector<16x128xf32>
    %c0_1 = arith.constant 0 : index
    %c0_2 = arith.constant 0 : index
    %1 = vector.load %arg2[%c0_1, %c0_2] : memref<128x128xf32, #tpu.memory_space<vmem>>, vector<128x128xf32>
    %cst = arith.constant dense<0.000000e+00> : vector<16x128xf32>
    %2 = tpu.matmul %0, %1, %cst {dimension_numbers = #tpu.dot_dimension_numbers<[1], [0], [0], [1], [0, 0, 1, 1], [], []>} : vector<16x128xf32>, vector<128x128xf32>, vector<16x128xf32> -> vector<16x128xf32>
    %c0_3 = arith.constant 0 : index
    %c0_4 = arith.constant 0 : index
    %3 = vector.load %arg3[%c0_3, %c0_4] : memref<1x128xf32, #tpu.memory_space<vmem>>, vector<1x128xf32>
    %4 = vector.broadcast %3 : vector<1x128xf32> to vector<16x128xf32>
    %5 = arith.addf %2, %4 : vector<16x128xf32>
    %cst_5 = arith.constant 0.000000e+00 : f32
    %6 = vector.broadcast %cst_5 : f32 to vector<16x128xf32>
    %7 = arith.maximumf %5, %6 : vector<16x128xf32>
    %c0_6 = arith.constant 0 : index
    %c0_7 = arith.constant 0 : index
    %8 = vector.load %arg4[%c0_6, %c0_7] : memref<128x128xf32, #tpu.memory_space<vmem>>, vector<128x128xf32>
    %cst_8 = arith.constant dense<0.000000e+00> : vector<16x128xf32>
    %9 = tpu.matmul %7, %8, %cst_8 {dimension_numbers = #tpu.dot_dimension_numbers<[1], [0], [0], [1], [0, 0, 1, 1], [], []>} : vector<16x128xf32>, vector<128x128xf32>, vector<16x128xf32> -> vector<16x128xf32>
    %c0_9 = arith.constant 0 : index
    %c0_10 = arith.constant 0 : index
    %10 = vector.load %arg5[%c0_9, %c0_10] : memref<1x128xf32, #tpu.memory_space<vmem>>, vector<1x128xf32>
    %11 = vector.broadcast %10 : vector<1x128xf32> to vector<16x128xf32>
    %12 = arith.addf %9, %11 : vector<16x128xf32>
    %c0_11 = arith.constant 0 : index
    %c0_12 = arith.constant 0 : index
    %13 = vector.load %arg6[%c0_11, %c0_12] : memref<16x128xf32, #tpu.memory_space<vmem>>, vector<16x128xf32>
    tpu.vector_store %arg6[%c0_11, %c0_12], %12 {strides = array<i32>} : memref<16x128xf32, #tpu.memory_space<vmem>>, vector<16x128xf32>,
    return
  }
  func.func @transform_0(%arg0: i32) -> (i32, i32) {
    %c0_i32 = arith.constant 0 : i32
    %c0_i32_0 = arith.constant 0 : i32
    return %arg0, %c0_i32 : i32, i32
  }
  func.func @transform_1(%arg0: i32) -> (i32, i32) {
    %c0_i32 = arith.constant 0 : i32
    %c0_i32_0 = arith.constant 0 : i32
    %c0_i32_1 = arith.constant 0 : i32
    return %c0_i32, %c0_i32_0 : i32, i32
  }
  func.func @transform_2(%arg0: i32) -> (i32, i32) {
    %c0_i32 = arith.constant 0 : i32
    %c0_i32_0 = arith.constant 0 : i32
    %c0_i32_1 = arith.constant 0 : i32
    return %c0_i32, %c0_i32_0 : i32, i32
  }
  func.func @transform_3(%arg0: i32) -> (i32, i32) {
    %c0_i32 = arith.constant 0 : i32
    %c0_i32_0 = arith.constant 0 : i32
    %c0_i32_1 = arith.constant 0 : i32
    return %c0_i32, %c0_i32_0 : i32, i32
  }
  func.func @transform_4(%arg0: i32) -> (i32, i32) {
    %c0_i32 = arith.constant 0 : i32
    %c0_i32_0 = arith.constant 0 : i32
    %c0_i32_1 = arith.constant 0 : i32
    return %c0_i32, %c0_i32_0 : i32, i32
  }
  func.func @transform_5(%arg0: i32) -> (i32, i32) {
    %c0_i32 = arith.constant 0 : i32
    %c0_i32_0 = arith.constant 0 : i32
    return %arg0, %c0_i32 : i32, i32
  }
}

</mosaic_0001>

<llo_original>
// kernel: _ffn_padded.1
$region0: #{_ffn_padded.1}
  #allocation0 [shape = 'u32[]', space=smem, size = 0x4, offset = 0x4, fixed_abs, tag = 'smem constant byte address 0x4 - core index']
  #allocation1 [shape = 'u32[72,128]{1,0:T(1,128)}', space=vmem, size = 0x9000, scoped, tag = 'internal scratch']
  %s0 = inlined_call_operand.vmem [shape: f32[16,128], index: 0, kind: input, shape index: {}]
  %s1 = inlined_call_operand.hbm [shape: f32[128,128], index: 1, kind: input, shape index: {}]
  %s2 = inlined_call_operand.vmem [shape: f32[1,128], index: 2, kind: input, shape index: {}]
  %s3 = inlined_call_operand.hbm [shape: f32[128,128], index: 3, kind: input, shape index: {}]
  %s4 = inlined_call_operand.vmem [shape: f32[1,128], index: 4, kind: input, shape index: {}]
  %s5 = inlined_call_operand.vmem [shape: f32[16,128], index: 5, kind: output, shape index: {}]
  %s6 = sld [smem:[#allocation0]]
  $region38: #{_ffn_padded.1} parent=0
    _
  %s8 = ssub.s32 1, %s6
  %s9 = scalar_select 0, %s8, %s6
  $region1: #{_ffn_padded.1} parent=0
    #allocation2 [shape = 'u8[65536]{0}', space=vmem, size = 0x10000, scoped, tag = 'input window, operand 1, single buffered']
    #allocation3 [shape = 's32[1]{0}', space=sflag, size = 0x4, scoped, tag = 'scoped memory for _ffn_padded.1']
    #allocation4 [shape = 'u8[65536]{0}', space=vmem, size = 0x10000, scoped, tag = 'input window, operand 3, single buffered']
    #allocation5 [shape = 's32[1]{0}', space=sflag, size = 0x4, scoped, tag = 'scoped memory for _ffn_padded.1']
    %10 = vsyncpa [#allocation3], 0
    %11 = vsyncpa [#allocation5], 0
    // Predicated region
    $region2: #{_ffn_padded.1} parent=1 // pred_check
      _
    $region3: #{_ffn_padded.1} parent=1 // pred_check_branch
      %13 = sbr.rel (0) target = $region5
    $region4: #{_ffn_padded.1} parent=1 // pred_region
      _
    $region5: #{_ffn_padded.1} parent=1 // pred_fallthru
      _
    // Predicated region
    $region6: #{_ffn_padded.1} parent=1 // pred_check
      _
    $region7: #{_ffn_padded.1} parent=1 // pred_check_branch
      %15 = sbr.rel (0) target = $region9
    $region8: #{_ffn_padded.1} parent=1 // pred_region
      %17 = vsyncadd [#allocation3], 0
      %s18 = sshll.u32 %s1, 4
      %s19 = int_to_ptr.hbm [resolvable:$true] %s18
      %s20 = sshll.u32 [#allocation2], 4
      %s21 = int_to_ptr.vmem [resolvable:$true] %s20
      %26 = dma.hbm_to_vmem [thread:$0]  %s19, 2048, %s21, [#allocation3], 128, 128, 8
    $region9: #{_ffn_padded.1} parent=1 // pred_fallthru
      _
    // Predicated region
    $region10: #{_ffn_padded.1} parent=1 // pred_check
      _
    $region11: #{_ffn_padded.1} parent=1 // pred_check_branch
      %28 = sbr.rel (0) target = $region13
    $region12: #{_ffn_padded.1} parent=1 // pred_region
      _
    $region13: #{_ffn_padded.1} parent=1 // pred_fallthru
      _
    // Predicated region
    $region14: #{_ffn_padded.1} parent=1 // pred_check
      _
    $region15: #{_ffn_padded.1} parent=1 // pred_check_branch
      %30 = sbr.rel (0) target = $region17
    $region16: #{_ffn_padded.1} parent=1 // pred_region
      %32 = vsyncadd [#allocation5], 0
      %s33 = sshll.u32 %s3, 4
      %s34 = int_to_ptr.hbm [resolvable:$true] %s33
      %s35 = sshll.u32 [#allocation4], 4
      %s36 = int_to_ptr.vmem [resolvable:$true] %s35
      %41 = dma.hbm_to_vmem [thread:$0]  %s34, 2048, %s36, [#allocation5], 128, 128, 8
    $region17: #{_ffn_padded.1} parent=1 // pred_fallthru
      _
    // Predicated region
    $region18: #{_ffn_padded.1} parent=1 // pred_check
      _
    $region19: #{_ffn_padded.1} parent=1 // pred_check_branch
      %43 = sbr.rel (0) target = $region21
    $region20: #{_ffn_padded.1} parent=1 // pred_region
      _
    $region21: #{_ffn_padded.1} parent=1 // pred_fallthru
      _
    // Predicated region
    $region22: #{_ffn_padded.1} parent=1 // pred_check
      _
    $region23: #{_ffn_padded.1} parent=1 // pred_check_branch
      %45 = sbr.rel (0) target = $region25
    $region24: #{_ffn_padded.1} parent=1 // pred_region
      %47 = dma.done [#allocation3], 2048
    $region25: #{_ffn_padded.1} parent=1 // pred_fallthru
      _
    // Predicated region
    $region26: #{_ffn_padded.1} parent=1 // pred_check
      _
    $region27: #{_ffn_padded.1} parent=1 // pred_check_branch
      %49 = sbr.rel (0) target = $region29
    $region28: #{_ffn_padded.1} parent=1 // pred_region
      %51 = dma.done [#allocation5], 2048
    $region29: #{_ffn_padded.1} parent=1 // pred_fallthru
      _
    %v52 = vld [vmem:[%s0] sm:$0xff]
    %v53 = vld [vmem:[%s0 + $0x8] sm:$0xff]
    %v54 = vld [vmem:[#allocation2] sm:$0xff]
    %v55 = vld [vmem:[#allocation2 + $0x8] sm:$0xff]
    %v56 = vld [vmem:[#allocation2 + $0x10] sm:$0xff]
    %v57 = vld [vmem:[#allocation2 + $0x18] sm:$0xff]
    %v58 = vld [vmem:[#allocation2 + $0x20] sm:$0xff]
    %v59 = vld [vmem:[#allocation2 + $0x28] sm:$0xff]
    %v60 = vld [vmem:[#allocation2 + $0x30] sm:$0xff]
    %v61 = vld [vmem:[#allocation2 + $0x38] sm:$0xff]
    %v62 = vld [vmem:[#allocation2 + $0x40] sm:$0xff]
    %v63 = vld [vmem:[#allocation2 + $0x48] sm:$0xff]
    %v64 = vld [vmem:[#allocation2 + $0x50] sm:$0xff]
    %v65 = vld [vmem:[#allocation2 + $0x58] sm:$0xff]
    %v66 = vld [vmem:[#allocation2 + $0x60] sm:$0xff]
    %v67 = vld [vmem:[#allocation2 + $0x68] sm:$0xff]
    %v68 = vld [vmem:[#allocation2 + $0x70] sm:$0xff]
    %v69 = vld [vmem:[#allocation2 + $0x78] sm:$0xff]
    %v70 = vld [vmem:[%s2] sm:$0x1]
    %v72 = vperm.slane %v70, 0
    %74 = vmatpush.msra.mxu0 %v69
    %75 = vmatpush.msra.mxu0 %v68
    %76 = vmatpush.msra.mxu0 %v67
    %77 = vmatpush.msra.mxu0 %v66
    %78 = vmatpush.msra.mxu0 %v65
    %79 = vmatpush.msra.mxu0 %v64
    %80 = vmatpush.msra.mxu0 %v63
    %81 = vmatpush.msra.mxu0 %v62
    %82 = vmatpush.msra.mxu0 %v61
    %83 = vmatpush.msra.mxu0 %v60
    %84 = vmatpush.msra.mxu0 %v59
    %85 = vmatpush.msra.mxu0 %v58
    %86 = vmatpush.msra.mxu0 %v57
    %87 = vmatpush.msra.mxu0 %v56
    %88 = vmatpush.msra.mxu0 %v55
    %89 = vmatpush.msra.mxu0 %v54
    %90 = vmatmul.f32.gmra.mxu0 %v52
    %v91 = vpop.f32.mrf.mxu0
    %v92 = vadd.f32 %v72, %v91
    %93 = vmatmul.f32.gmra.mxu0 %v53
    %v94 = vpop.f32.mrf.mxu0
    %v95 = vadd.f32 %v72, %v94
    %96 = vdwg.mxu0
    %v97 = vmax.f32 %v92, 0.0
    %v98 = vmax.f32 %v95, 0.0
    %v99 = vld [vmem:[#allocation4] sm:$0xff]
    %v100 = vld [vmem:[#allocation4 + $0x8] sm:$0xff]
    %v101 = vld [vmem:[#allocation4 + $0x10] sm:$0xff]
    %v102 = vld [vmem:[#allocation4 + $0x18] sm:$0xff]
    %v103 = vld [vmem:[#allocation4 + $0x20] sm:$0xff]
    %v104 = vld [vmem:[#allocation4 + $0x28] sm:$0xff]
    %v105 = vld [vmem:[#allocation4 + $0x30] sm:$0xff]
    %v106 = vld [vmem:[#allocation4 + $0x38] sm:$0xff]
    %v107 = vld [vmem:[#allocation4 + $0x40] sm:$0xff]
    %v108 = vld [vmem:[#allocation4 + $0x48] sm:$0xff]
    %v109 = vld [vmem:[#allocation4 + $0x50] sm:$0xff]
    %v110 = vld [vmem:[#allocation4 + $0x58] sm:$0xff]
    %v111 = vld [vmem:[#allocation4 + $0x60] sm:$0xff]
    %v112 = vld [vmem:[#allocation4 + $0x68] sm:$0xff]
    %v113 = vld [vmem:[#allocation4 + $0x70] sm:$0xff]
    %v114 = vld [vmem:[#allocation4 + $0x78] sm:$0xff]
    %v115 = vld [vmem:[%s4] sm:$0x1]
    %v117 = vperm.slane %v115, 0
    %119 = vmatpush.msra.mxu0 %v114
    %120 = vmatpush.msra.mxu0 %v113
    %121 = vmatpush.msra.mxu0 %v112
    %122 = vmatpush.msra.mxu0 %v111
    %123 = vmatpush.msra.mxu0 %v110
    %124 = vmatpush.msra.mxu0 %v109
    %125 = vmatpush.msra.mxu0 %v108
    %126 = vmatpush.msra.mxu0 %v107
    %127 = vmatpush.msra.mxu0 %v106
    %128 = vmatpush.msra.mxu0 %v105
    %129 = vmatpush.msra.mxu0 %v104
    %130 = vmatpush.msra.mxu0 %v103
    %131 = vmatpush.msra.mxu0 %v102
    %132 = vmatpush.msra.mxu0 %v101
    %133 = vmatpush.msra.mxu0 %v100
    %134 = vmatpush.msra.mxu0 %v99
    %135 = vmatmul.f32.gmra.mxu0 %v97
    %v136 = vpop.f32.mrf.mxu0
    %v137 = vadd.f32 %v117, %v136
    %138 = vmatmul.f32.gmra.mxu0 %v98
    %v139 = vpop.f32.mrf.mxu0
    %v140 = vadd.f32 %v117, %v139
    %141 = vdwg.mxu0
    %142 = vst [vmem:[%s5] sm:$0xff] %v137
    %143 = vst [vmem:[%s5 + $0x8] sm:$0xff] %v140
    // Predicated region
    $region30: #{_ffn_padded.1} parent=1 // pred_check
      _
    $region31: #{_ffn_padded.1} parent=1 // pred_check_branch
      %145 = sbr.rel (0) target = $region33
    $region32: #{_ffn_padded.1} parent=1 // pred_region
      _
    $region33: #{_ffn_padded.1} parent=1 // pred_fallthru
      _
    // Predicated region
    $region34: #{_ffn_padded.1} parent=1 // pred_check
      _
    $region35: #{_ffn_padded.1} parent=1 // pred_check_branch
      %147 = sbr.rel (0) target = $region37
    $region36: #{_ffn_padded.1} parent=1 // pred_region
      _
    $region37: #{_ffn_padded.1} parent=1 // pred_fallthru
      _
    %148 = vsyncpa [#allocation3], 1
    %149 = vsyncpa [#allocation5], 1

</llo_original>
